<compile_context>
chip_gen: v7x
topology: tpu7x:2x2x1
jax: 0.10.0
libtpu: 0.0.40
codegen_flags: <defaults>
</compile_context>

<pallas_src>
import math

import jax
import jax.numpy as jnp
from jax.experimental import pallas as pl
from jax.experimental.pallas import tpu as pltpu

NEG_SLOPE = 0.2
SQRT2 = math.sqrt(2.0)
_POS = SQRT2               # slope for x >= 0, scale folded in
_NEG = NEG_SLOPE * SQRT2   # slope for x <  0, scale folded in
LANE = 128


def _scaled_leaky_relu_kernel(x_ref, o_ref):
    x = x_ref[...]
    # cmp + select + single mul (constants folded at trace time).
    o_ref[...] = (x * jnp.where(x >= 0, _POS, _NEG)).astype(o_ref.dtype)


def scaled_leaky_relu(x, *, tile_rows=2048, donate=False):
    """leaky_relu(x, 0.2) * sqrt(2), elementwise, via a tiled Pallas kernel.

    Accepts any shape (e.g. NCHW). Internally views the data as a lane-dense
    (rows, 128) slab; only pads by the minimal amount (to a multiple of 128),
    and emits no pad / no output-slice copy when x.size % 128 == 0.
    """
    orig_shape = x.shape
    orig_dtype = x.dtype
    n = x.size
    if n == 0:
        return x

    flat = jnp.ravel(x)
    n_pad = pl.cdiv(n, LANE) * LANE
    padded = n_pad != n
    if padded:
        flat = jnp.pad(flat, (0, n_pad - n))
    rows = n_pad // LANE
    x2d = flat.reshape(rows, LANE)

    # ~1 MiB (f32) blocks; sublane dim must be a multiple of 8 or the full
    # extent. Ragged last block along the grid is handled by Pallas.
    tile_rows = max(8, (int(tile_rows) // 8) * 8)
    tile = rows if rows <= tile_rows else tile_rows
    grid = (pl.cdiv(rows, tile),)

    itemsize = jnp.dtype(orig_dtype).itemsize
    cost = pl.CostEstimate(
        flops=2 * n_pad,
        transcendentals=0,
        bytes_accessed=2 * n_pad * itemsize,
    )

    extra = {}
    if donate and not padded:
        # Reuse the input HBM buffer for the output on the fast path.
        extra["input_output_aliases"] = {0: 0}

    out2d = pl.pallas_call(
        _scaled_leaky_relu_kernel,
        out_shape=jax.ShapeDtypeStruct((rows, LANE), orig_dtype),
        grid_spec=pltpu.PrefetchScalarGridSpec(
            num_scalar_prefetch=0,
            grid=grid,
            in_specs=[pl.BlockSpec((tile, LANE), lambda i: (i, 0))],
            out_specs=pl.BlockSpec((tile, LANE), lambda i: (i, 0)),
        ),
        compiler_params=pltpu.CompilerParams(
            dimension_semantics=("parallel",),
        ),
        cost_estimate=cost,
        **extra,
    )(x2d)

    if padded:
        return out2d.reshape(-1)[:n].reshape(orig_shape)
    return out2d.reshape(orig_shape)


if __name__ == "__main__":
    key = jax.random.PRNGKey(0)
    k0, k1, k2 = jax.random.split(key, 3)

    def ref_fn(v):
        return jnp.where(v >= 0, v, v * NEG_SLOPE) * SQRT2

    # 1) NCHW activation, size % 128 == 0 -> fast path (no pad, no slice).
    x = jax.random.normal(k0, (2, 4, 16, 16), dtype=jnp.float32)
    out = jax.block_until_ready(scaled_leaky_relu(x))
    assert out.shape == x.shape and out.dtype == x.dtype
    assert jnp.allclose(out, ref_fn(x), atol=1e-6, rtol=1e-6)

    # 2) Size not a multiple of 128 -> minimal-pad fallback path.
    x2 = jax.random.normal(k1, (2, 3, 7, 5), dtype=jnp.float32)
    out2 = jax.block_until_ready(scaled_leaky_relu(x2))
    assert out2.shape == x2.shape
    assert jnp.allclose(out2, ref_fn(x2), atol=1e-6, rtol=1e-6)

    # 3) Multi-block grid with a ragged last block (small tile to force it).
    x3 = jax.random.normal(k2, (2, 4, 16, 18), dtype=jnp.float32)
    out3 = jax.block_until_ready(scaled_leaky_relu(x3, tile_rows=8))
    assert out3.shape == x3.shape
    assert jnp.allclose(out3, ref_fn(x3), atol=1e-6, rtol=1e-6)

    print("KERNEL_OK")
</pallas_src>

<mosaic_0001>
module attributes {stable_mosaic.version = 11 : i64} {
  func.func @_scaled_leaky_relu_kernel(%arg0: i32, %arg1: memref<16x128xf32, #tpu.memory_space<vmem>>, %arg2: memref<16x128xf32, #tpu.memory_space<vmem>>) attributes {dimension_semantics = [#tpu.dimension_semantics<parallel>], iteration_bounds = array<i64: 1>, scalar_prefetch = 0 : i64, scratch_operands = 0 : i64, tpu.core_type = #tpu.core_type<tc>, window_params = [{transform_indices = @transform_0, window_bounds = array<i64: 16, 128>}, {transform_indices = @transform_1, window_bounds = array<i64: 16, 128>}]} {
    %c0 = arith.constant 0 : index
    %c0_0 = arith.constant 0 : index
    %0 = vector.load %arg1[%c0, %c0_0] : memref<16x128xf32, #tpu.memory_space<vmem>>, vector<16x128xf32>
    %cst = arith.constant 0.000000e+00 : f32
    %1 = vector.broadcast %cst : f32 to vector<16x128xf32>
    %2 = arith.cmpf oge, %0, %1 : vector<16x128xf32>
    %cst_1 = arith.constant 1.41421354 : f32
    %cst_2 = arith.constant 0.282842726 : f32
    %3 = vector.broadcast %cst_1 : f32 to vector<16x128xf32>
    %4 = vector.broadcast %cst_2 : f32 to vector<16x128xf32>
    %5 = arith.select %2, %3, %4 : vector<16x128xi1>, vector<16x128xf32>
    %6 = arith.mulf %0, %5 : vector<16x128xf32>
    %c0_3 = arith.constant 0 : index
    %c0_4 = arith.constant 0 : index
    %7 = vector.load %arg2[%c0_3, %c0_4] : memref<16x128xf32, #tpu.memory_space<vmem>>, vector<16x128xf32>
    tpu.vector_store %arg2[%c0_3, %c0_4], %6 {strides = array<i32>} : memref<16x128xf32, #tpu.memory_space<vmem>>, vector<16x128xf32>,
    return
  }
  func.func @transform_0(%arg0: i32) -> (i32, i32) {
    %c0_i32 = arith.constant 0 : i32
    %c0_i32_0 = arith.constant 0 : i32
    return %arg0, %c0_i32 : i32, i32
  }
  func.func @transform_1(%arg0: i32) -> (i32, i32) {
    %c0_i32 = arith.constant 0 : i32
    %c0_i32_0 = arith.constant 0 : i32
    return %arg0, %c0_i32 : i32, i32
  }
}

</mosaic_0001>

<llo_original>
// kernel: tpu_custom_call.1
$region0: #{tpu_custom_call.1}
  #allocation0 [shape = 'u32[]', space=smem, size = 0x4, offset = 0x4, fixed_abs, tag = 'smem constant byte address 0x4 - core index']
  #allocation1 [shape = 'u32[144,128]{1,0:T(1,128)}', space=vmem, size = 0x12000, scoped, tag = 'internal scratch']
  %s0 = inlined_call_operand.hbm [shape: f32[16,128], index: 0, kind: input, shape index: {}]
  %s1 = inlined_call_operand.hbm [shape: f32[16,128], index: 1, kind: output, shape index: {}]
  %s2 = sld [smem:[#allocation0]]
  $region18: #{tpu_custom_call.1} parent=0
    _
  %s4 = ssub.s32 1, %s2
  %s5 = scalar_select 0, %s4, %s2
  $region1: #{tpu_custom_call.1} parent=0
    #allocation2 [shape = 'u8[8192]{0}', space=vmem, size = 0x2000, scoped, tag = 'input window, operand 0, single buffered']
    #allocation3 [shape = 's32[1]{0}', space=sflag, size = 0x4, scoped, tag = 'scoped memory for tpu_custom_call.1']
    #allocation4 [shape = 's32[1]{0}', space=sflag, size = 0x4, scoped, tag = 'scoped memory for tpu_custom_call.1']
    #allocation5 [shape = 'u8[8192]{0}', space=vmem, size = 0x2000, scoped, tag = 'output window, operand 0, single buffered']
    %6 = vsyncpa [#allocation3], 0
    %7 = vsyncpa [#allocation4], 0
    // Predicated region
    $region2: #{tpu_custom_call.1} parent=1 // pred_check
      _
    $region3: #{tpu_custom_call.1} parent=1 // pred_check_branch
      %9 = sbr.rel (0) target = $region5
    $region4: #{tpu_custom_call.1} parent=1 // pred_region
      %s11 = ssub.s32 256, 256
      %12 = vsyncadd [#allocation3], %s11
      %s13 = sshll.u32 [#allocation2], 4
      %s14 = int_to_ptr.vmem [resolvable:$true] %s13
      %19 = dma.hbm_to_vmem [thread:$0]  %s0, 256, %s14, [#allocation3], 128, 128, 8
    $region5: #{tpu_custom_call.1} parent=1 // pred_fallthru
      _
    // Predicated region
    $region6: #{tpu_custom_call.1} parent=1 // pred_check
      _
    $region7: #{tpu_custom_call.1} parent=1 // pred_check_branch
      %21 = sbr.rel (0) target = $region9
    $region8: #{tpu_custom_call.1} parent=1 // pred_region
      %22 = dma.done [#allocation3], 256
    $region9: #{tpu_custom_call.1} parent=1 // pred_fallthru
      _
    %v23 = vld [vmem:[#allocation2] sm:$0xff]
    %v24 = vld [vmem:[#allocation2 + $0x8] sm:$0xff]
    %vm25 = vcmp.ge.f32.partialorder %v23, 0.0
    %vm26 = vcmp.ge.f32.partialorder %v24, 0.0
    %v27 = vsel %vm25, 1.4142135, 0.28284273
    %v28 = vsel %vm26, 1.4142135, 0.28284273
    %v29 = vmul.f32 %v23, %v27
    %v30 = vmul.f32 %v24, %v28
    %31 = vst [vmem:[#allocation5] sm:$0xff] %v29
    %32 = vst [vmem:[#allocation5 + $0x8] sm:$0xff] %v30
    // Predicated region
    $region10: #{tpu_custom_call.1} parent=1 // pred_check
      _
    $region11: #{tpu_custom_call.1} parent=1 // pred_check_branch
      %34 = sbr.rel (0) target = $region13
    $region12: #{tpu_custom_call.1} parent=1 // pred_region
      %s36 = ssub.s32 256, 256
      %37 = vsyncadd [#allocation4], %s36
      %s38 = sshll.u32 [#allocation5], 4
      %s39 = int_to_ptr.vmem [resolvable:$true] %s38
      %44 = dma.vmem_to_hbm [thread:$0]  %s39, 256, %s1, [#allocation4], 128, 128, 8
    $region13: #{tpu_custom_call.1} parent=1 // pred_fallthru
      _
    // Predicated region
    $region14: #{tpu_custom_call.1} parent=1 // pred_check
      _
    $region15: #{tpu_custom_call.1} parent=1 // pred_check_branch
      %46 = sbr.rel (0) target = $region17
    $region16: #{tpu_custom_call.1} parent=1 // pred_region
      %47 = dma.done [#allocation4], 256
    $region17: #{tpu_custom_call.1} parent=1 // pred_fallthru
      _
    %48 = vsyncpa [#allocation3], 1
    %49 = vsyncpa [#allocation4], 1

</llo_original>
